<compile_context>
chip_gen: v7x
topology: tpu7x:2x2x1
jax: 0.10.0
libtpu: 0.0.40
codegen_flags: <defaults>
</compile_context>

<pallas_src>
import numpy as np
import jax
import jax.numpy as jnp
from jax import lax
from jax.experimental import pallas as pl
from jax.experimental.pallas import tpu as pltpu

THRESH = 0.01  # the "nu" threshold from the paper (module default)


def _round_up(v, m):
    return ((v + m - 1) // m) * m


def _make_kernel(compute_dtype):
    def topo_signature_kernel(slices_ref, x_ref, params_ref, out_ref):
        k = pl.program_id(2)          # N (reduction) axis — innermost, "arbitrary"

        @pl.when(k == 0)
        def _():
            out_ref[...] = jnp.zeros_like(out_ref)

        # preprocessed points: col 0 = rotated x0, col 1 = branch-resolved x1
        x0 = x_ref[:, 0:1].astype(compute_dtype)        # (TN, 1)
        x1 = x_ref[:, 1:2].astype(compute_dtype)        # (TN, 1)

        params = params_ref[...].astype(compute_dtype)  # (8, TU) packed block
        mu0, mu1 = params[0:1, :], params[1:2, :]
        sigma0, sigma1 = params[2:3, :], params[3:4, :]

        # single fused exp over the whole (TN, TU) tile
        d0 = jnp.square(sigma0 * (x0 - mu0))
        d1 = jnp.square(sigma1 * (x1 - mu1))
        out_pts = jnp.exp(-(d0 + d1))                   # (TN, TU)

        # one-hot segment tile (D_pad, TN), rebuilt per N tile (d_pad is tiny)
        tn = x_ref.shape[0]
        d_pad = slices_ref.shape[0]
        blk = pl.program_id(0) * pl.num_programs(2) + k        # global N-tile id
        idx = blk * tn + lax.broadcasted_iota(jnp.int32, (d_pad, tn), 1)
        starts = slices_ref[:, 0:1]                     # (D_pad, 1)
        ends = slices_ref[:, 1:2]                       # (D_pad, 1)
        seg = ((idx >= starts) & (idx < ends)).astype(jnp.bfloat16)

        # per-diagram row-range sums on the otherwise idle MXU.
        # bf16 operands (seg is exact 0/1; out_pts rel err <= 2^-9), f32 accum.
        out_ref[...] += jnp.dot(seg, out_pts.astype(jnp.bfloat16),
                                preferred_element_type=jnp.float32)

    return topo_signature_kernel


def topo_signature_layer(X_persis, diagram_slices,
                         mu0, log_mu1, log_sigma0, log_sigma1,
                         *, threshold=THRESH, tile_n=1024, tile_u=128,
                         compute_dtype=jnp.float32):
    """X_persis: (N, 2) f32; diagram_slices: (num_diag, 2) int -> (num_diag, U) f32."""
    X_persis = X_persis.astype(jnp.float32)
    n_points = int(X_persis.shape[0])
    num_units = int(mu0.shape[0])
    num_diag = int(diagram_slices.shape[0])

    # ---- hoisted preprocessing: rotation + nu-threshold branch + log -------
    c = np.float32(np.cos(-np.pi / 4.0))
    s = np.float32(np.sin(-np.pi / 4.0))
    xb, xd = X_persis[:, 0:1], X_persis[:, 1:2]
    x0 = c * xb - s * xd                                       # X_rot[:, 0]
    x1 = s * xb + c * xd                                       # X_rot[:, 1]
    x1_log = jnp.log(x1 * np.float32(1.0 / threshold)) * threshold + threshold
    x1_sel = jnp.where(x0 >= threshold, x1, x1_log)
    x_pre = jnp.concatenate([x0, x1_sel], axis=1)              # (N, 2), finite

    # ---- padding / tiling ---------------------------------------------------
    tile_u = max(128, _round_up(tile_u, 128))
    u_pad = _round_up(max(num_units, 1), tile_u)
    u_tiles = u_pad // tile_u

    tile_n = min(tile_n, _round_up(max(n_points, 1), 256))
    tile_n = max(256, _round_up(tile_n, 256))

    # split the N reduction across two "parallel" output copies when there is
    # only one U tile so both v7x TensorCores get work (no-op on 1-TC chips)
    n_split = 2 if (u_tiles == 1 and n_points > tile_n) else 1
    n_pad = _round_up(max(n_points, 1), tile_n * n_split)
    k_per_split = n_pad // (tile_n * n_split)

    d_pad = _round_up(max(num_diag, 1), 8)

    # padded points are zeros (finite); they fall outside every [start, end)
    # range so the in-kernel segment mask zeroes their contribution.
    x = jnp.zeros((n_pad, 2), jnp.float32).at[:n_points].set(x_pre)
    slices = jnp.zeros((d_pad, 2), jnp.int32).at[:num_diag].set(
        diagram_slices.astype(jnp.int32))

    # parameter exps hoisted; all four rows packed into one (8, u_pad) block
    # (one DMA / one double-buffer instead of four).  Pad value 1.0 stays finite.
    params = jnp.ones((8, u_pad), jnp.float32)
    params = params.at[0, :num_units].set(mu0.astype(jnp.float32))
    params = params.at[1, :num_units].set(jnp.exp(log_mu1).astype(jnp.float32))
    params = params.at[2, :num_units].set(jnp.exp(log_sigma0).astype(jnp.float32))
    params = params.at[3, :num_units].set(jnp.exp(log_sigma1).astype(jnp.float32))

    grid = (n_split, u_tiles, k_per_split)

    out = pl.pallas_call(
        _make_kernel(compute_dtype),
        out_shape=jax.ShapeDtypeStruct((n_split, d_pad, u_pad), jnp.float32),
        grid=grid,
        in_specs=[
            pl.BlockSpec((d_pad, 2), lambda sp, u, k: (0, 0)),        # slice table
            pl.BlockSpec((tile_n, 2),                                  # [x0, x1_sel]
                         lambda sp, u, k: (sp * k_per_split + k, 0)),
            pl.BlockSpec((8, tile_u), lambda sp, u, k: (0, u)),        # packed params
        ],
        out_specs=pl.BlockSpec((None, d_pad, tile_u), lambda sp, u, k: (sp, 0, u)),
        compiler_params=pltpu.CompilerParams(
            dimension_semantics=("parallel", "parallel", "arbitrary"),
            vmem_limit_bytes=32 * 1024 * 1024),
    )(slices, x, params)

    out = jnp.sum(out, axis=0)          # combine the n_split partial sums
    return out[:num_diag, :num_units]


def topo_signature_ref(X_persis, diagram_slices,
                       mu0, log_mu1, log_sigma0, log_sigma1, *, threshold=THRESH):
    """Plain-JAX reference mirroring the torch forward."""
    angle = -45.0 * np.pi / 180.0
    s, c = np.sin(angle), np.cos(angle)
    rotate = jnp.array([[c, -s], [s, c]], dtype=jnp.float32)
    X_rot = (rotate @ X_persis.T).T
    mu1 = jnp.exp(log_mu1)
    sigma0, sigma1 = jnp.exp(log_sigma0), jnp.exp(log_sigma1)
    d0 = jnp.square(sigma0 * (X_rot[:, 0:1] - mu0[None, :]))
    log_t1 = -(d0 + jnp.square(sigma1 * (X_rot[:, 1:2] - mu1[None, :])))
    x1l = (jnp.log(X_rot[:, 1] / threshold) * threshold + threshold)[:, None]
    log_t2 = -(d0 + jnp.square(sigma1 * (x1l - mu1[None, :])))
    term1, term2 = jnp.exp(log_t1), jnp.exp(log_t2)
    cond = (X_rot[:, 0] >= threshold)[:, None].astype(jnp.float32)
    output = cond * term1 + (1.0 - cond) * term2
    rows = [output[int(st):int(en)].sum(axis=0)
            for st, en in np.asarray(diagram_slices)]
    return jnp.stack(rows)


if __name__ == "__main__":
    num_units = 32
    n_points = 24  # 3 diagrams of 8 points each

    key = jax.random.PRNGKey(0)
    k1, k2, k3, k4, k5, k6 = jax.random.split(key, 6)

    # deterministic "normal_" parameter init (shapes from __init__)
    mu0 = jax.random.normal(k1, (num_units,), jnp.float32)
    log_mu1 = jax.random.normal(k2, (num_units,), jnp.float32)
    log_sigma0 = jax.random.normal(k3, (num_units,), jnp.float32)
    log_sigma1 = jax.random.normal(k4, (num_units,), jnp.float32)

    # synthetic persistence pairs with death > birth (keeps log() finite)
    births = jax.random.uniform(k5, (n_points, 1), jnp.float32, 0.0, 0.5)
    deaths = births + jax.random.uniform(k6, (n_points, 1), jnp.float32, 0.05, 0.5)
    X_persis = jnp.concatenate([births, deaths], axis=1)          # (24, 2)
    # force a couple of low-persistence points onto the log (term2) branch
    X_persis = X_persis.at[0].set(jnp.array([0.001, 0.005], jnp.float32))
    X_persis = X_persis.at[12].set(jnp.array([0.002, 0.004], jnp.float32))
    diagram_slices = jnp.array([[0, 8], [8, 16], [16, 24]], jnp.int32)

    out = topo_signature_layer(X_persis, diagram_slices,
                               mu0, log_mu1, log_sigma0, log_sigma1)
    out = jax.block_until_ready(out)

    ref = topo_signature_ref(X_persis, diagram_slices,
                             mu0, log_mu1, log_sigma0, log_sigma1)
    # bf16 MXU operands bound the relative error by ~2^-9 on each (positive) sum
    np.testing.assert_allclose(np.asarray(out), np.asarray(ref),
                               rtol=5e-3, atol=1e-5)
    print("KERNEL_OK")
</pallas_src>

<mosaic_0001>
module attributes {stable_mosaic.version = 11 : i64} {
  func.func @topo_signature_kernel(%arg0: i32, %arg1: i32, %arg2: i32, %arg3: memref<8x2xi32, #tpu.memory_space<vmem>>, %arg4: memref<256x2xf32, #tpu.memory_space<vmem>>, %arg5: memref<8x128xf32, #tpu.memory_space<vmem>>, %arg6: memref<1x8x128xf32, #tpu.memory_space<vmem>>) attributes {dimension_semantics = [#tpu.dimension_semantics<parallel>, #tpu.dimension_semantics<parallel>, #tpu.dimension_semantics<arbitrary>], iteration_bounds = array<i64: 1, 1, 1>, scalar_prefetch = 0 : i64, scratch_operands = 0 : i64, tpu.core_type = #tpu.core_type<tc>, window_params = [{pipeline_mode = #tpu.pipeline_mode<synchronous>, transform_indices = @transform_0, window_bounds = array<i64: 8, 2>}, {transform_indices = @transform_1, window_bounds = array<i64: 256, 2>}, {transform_indices = @transform_2, window_bounds = array<i64: 8, 128>}, {transform_indices = @transform_3, window_bounds = array<i64: 1, 8, 128>}]} {
    %c0_i32 = arith.constant 0 : i32
    %0 = arith.cmpi eq, %arg2, %c0_i32 : i32
    %1 = arith.extui %0 : i1 to i32
    %c0_i32_0 = arith.constant 0 : i32
    %2 = arith.cmpi ne, %1, %c0_i32_0 : i32
    scf.if %2 {
      %cst_16 = arith.constant 0.000000e+00 : f32
      %50 = vector.broadcast %cst_16 : f32 to vector<8x128xf32>
      %c0_17 = arith.constant 0 : index
      %c0_18 = arith.constant 0 : index
      %c0_19 = arith.constant 0 : index
      %51 = vector.load %arg6[%c0_17, %c0_18, %c0_19] : memref<1x8x128xf32, #tpu.memory_space<vmem>>, vector<1x8x128xf32>
      %52 = vector.shape_cast %51 : vector<1x8x128xf32> to vector<8x128xf32>
      %53 = vector.shape_cast %50 : vector<8x128xf32> to vector<1x8x128xf32>
      tpu.vector_store %arg6[%c0_17, %c0_18, %c0_19], %53 {strides = array<i32>} : memref<1x8x128xf32, #tpu.memory_space<vmem>>, vector<1x8x128xf32>,
    } else {
    }
    %c0 = arith.constant 0 : index
    %c0_1 = arith.constant 0 : index
    %3 = vector.load %arg4[%c0, %c0_1] : memref<256x2xf32, #tpu.memory_space<vmem>>, vector<256x1xf32>
    %c0_2 = arith.constant 0 : index
    %c1 = arith.constant 1 : index
    %4 = vector.load %arg4[%c0_2, %c1] : memref<256x2xf32, #tpu.memory_space<vmem>>, vector<256x1xf32>
    %c0_3 = arith.constant 0 : index
    %c0_4 = arith.constant 0 : index
    %5 = vector.load %arg5[%c0_3, %c0_4] : memref<8x128xf32, #tpu.memory_space<vmem>>, vector<8x128xf32>
    %6 = vector.extract_strided_slice %5 {offsets = [0, 0], sizes = [1, 128], strides = [1, 1]} : vector<8x128xf32> to vector<1x128xf32>
    %7 = vector.extract_strided_slice %5 {offsets = [1, 0], sizes = [1, 128], strides = [1, 1]} : vector<8x128xf32> to vector<1x128xf32>
    %8 = vector.extract_strided_slice %5 {offsets = [2, 0], sizes = [1, 128], strides = [1, 1]} : vector<8x128xf32> to vector<1x128xf32>
    %9 = vector.extract_strided_slice %5 {offsets = [3, 0], sizes = [1, 128], strides = [1, 1]} : vector<8x128xf32> to vector<1x128xf32>
    %10 = vector.broadcast %3 : vector<256x1xf32> to vector<256x128xf32>
    %11 = vector.broadcast %6 : vector<1x128xf32> to vector<256x128xf32>
    %12 = arith.subf %10, %11 : vector<256x128xf32>
    %13 = vector.broadcast %8 : vector<1x128xf32> to vector<256x128xf32>
    %14 = arith.mulf %13, %12 : vector<256x128xf32>
    %15 = arith.mulf %14, %14 : vector<256x128xf32>
    %16 = vector.broadcast %4 : vector<256x1xf32> to vector<256x128xf32>
    %17 = vector.broadcast %7 : vector<1x128xf32> to vector<256x128xf32>
    %18 = arith.subf %16, %17 : vector<256x128xf32>
    %19 = vector.broadcast %9 : vector<1x128xf32> to vector<256x128xf32>
    %20 = arith.mulf %19, %18 : vector<256x128xf32>
    %21 = arith.mulf %20, %20 : vector<256x128xf32>
    %22 = arith.addf %15, %21 : vector<256x128xf32>
    %cst = arith.constant 0.000000e+00 : f32
    %23 = vector.broadcast %cst : f32 to vector<256x128xf32>
    %24 = arith.subf %23, %22 : vector<256x128xf32>
    %25 = math.exp %24 : vector<256x128xf32>
    %c1_i32 = arith.constant 1 : i32
    %26 = arith.muli %arg0, %c1_i32 : i32
    %27 = arith.addi %26, %arg2 : i32
    %c256_i32 = arith.constant 256 : i32
    %28 = arith.muli %27, %c256_i32 : i32
    %29 = tpu.iota {dimensions = array<i32: 1>} : vector<8x256xi32>
    %30 = vector.broadcast %28 : i32 to vector<8x256xi32>
    %31 = arith.addi %30, %29 : vector<8x256xi32>
    %c0_5 = arith.constant 0 : index
    %c0_6 = arith.constant 0 : index
    %32 = vector.load %arg3[%c0_5, %c0_6] : memref<8x2xi32, #tpu.memory_space<vmem>>, vector<8x1xi32>
    %c0_7 = arith.constant 0 : index
    %c1_8 = arith.constant 1 : index
    %33 = vector.load %arg3[%c0_7, %c1_8] : memref<8x2xi32, #tpu.memory_space<vmem>>, vector<8x1xi32>
    %34 = vector.broadcast %32 : vector<8x1xi32> to vector<8x256xi32>
    %35 = arith.cmpi sge, %31, %34 : vector<8x256xi32>
    %36 = vector.broadcast %33 : vector<8x1xi32> to vector<8x256xi32>
    %37 = arith.cmpi slt, %31, %36 : vector<8x256xi32>
    %38 = arith.andi %35, %37 : vector<8x256xi1>
    %39 = arith.extui %38 : vector<8x256xi1> to vector<8x256xi32>
    %40 = arith.sitofp %39 : vector<8x256xi32> to vector<8x256xf32>
    %41 = arith.truncf %40 : vector<8x256xf32> to vector<8x256xbf16>
    %c0_9 = arith.constant 0 : index
    %c0_10 = arith.constant 0 : index
    %c0_11 = arith.constant 0 : index
    %42 = vector.load %arg6[%c0_9, %c0_10, %c0_11] : memref<1x8x128xf32, #tpu.memory_space<vmem>>, vector<1x8x128xf32>
    %43 = vector.shape_cast %42 : vector<1x8x128xf32> to vector<8x128xf32>
    %44 = arith.truncf %25 : vector<256x128xf32> to vector<256x128xbf16>
    %cst_12 = arith.constant dense<0.000000e+00> : vector<8x128xf32>
    %45 = tpu.matmul %41, %44, %cst_12 {dimension_numbers = #tpu.dot_dimension_numbers<[1], [0], [0], [1], [0, 0, 1, 1], [], []>} : vector<8x256xbf16>, vector<256x128xbf16>, vector<8x128xf32> -> vector<8x128xf32>
    %46 = arith.addf %43, %45 : vector<8x128xf32>
    %c0_13 = arith.constant 0 : index
    %c0_14 = arith.constant 0 : index
    %c0_15 = arith.constant 0 : index
    %47 = vector.load %arg6[%c0_13, %c0_14, %c0_15] : memref<1x8x128xf32, #tpu.memory_space<vmem>>, vector<1x8x128xf32>
    %48 = vector.shape_cast %47 : vector<1x8x128xf32> to vector<8x128xf32>
    %49 = vector.shape_cast %46 : vector<8x128xf32> to vector<1x8x128xf32>
    tpu.vector_store %arg6[%c0_13, %c0_14, %c0_15], %49 {strides = array<i32>} : memref<1x8x128xf32, #tpu.memory_space<vmem>>, vector<1x8x128xf32>,
    return
  }
  func.func @transform_0(%arg0: i32, %arg1: i32, %arg2: i32) -> (i32, i32) {
    %c0_i32 = arith.constant 0 : i32
    %c0_i32_0 = arith.constant 0 : i32
    %c0_i32_1 = arith.constant 0 : i32
    return %c0_i32, %c0_i32_0 : i32, i32
  }
  func.func @transform_1(%arg0: i32, %arg1: i32, %arg2: i32) -> (i32, i32) {
    %c1_i32 = arith.constant 1 : i32
    %0 = arith.muli %arg0, %c1_i32 : i32
    %1 = arith.addi %0, %arg2 : i32
    %c0_i32 = arith.constant 0 : i32
    %c0_i32_0 = arith.constant 0 : i32
    return %1, %c0_i32 : i32, i32
  }
  func.func @transform_2(%arg0: i32, %arg1: i32, %arg2: i32) -> (i32, i32) {
    %c0_i32 = arith.constant 0 : i32
    %c0_i32_0 = arith.constant 0 : i32
    return %c0_i32, %arg1 : i32, i32
  }
  func.func @transform_3(%arg0: i32, %arg1: i32, %arg2: i32) -> (i32, i32, i32) {
    %c0_i32 = arith.constant 0 : i32
    %c0_i32_0 = arith.constant 0 : i32
    return %arg0, %c0_i32, %arg1 : i32, i32, i32
  }
}

</mosaic_0001>

<llo_original>
// kernel: tpu_custom_call.1
$region0: #{tpu_custom_call.1}
  #allocation0 [shape = 'u32[]', space=smem, size = 0x4, offset = 0x4, fixed_abs, tag = 'smem constant byte address 0x4 - core index']
  #allocation1 [shape = 'u32[144,128]{1,0:T(1,128)}', space=vmem, size = 0x12000, scoped, tag = 'internal scratch']
  %s0 = inlined_call_operand.vmem [shape: s32[8,2], index: 0, kind: input, shape index: {}]
  %s1 = inlined_call_operand.vmem [shape: f32[256,2], index: 1, kind: input, shape index: {}]
  %s2 = inlined_call_operand.vmem [shape: f32[8,128], index: 2, kind: input, shape index: {}]
  %s3 = inlined_call_operand.hbm [shape: f32[1,8,128], index: 3, kind: output, shape index: {}]
  %s4 = sld [smem:[#allocation0]]
  $region26: #{tpu_custom_call.1} parent=0
    _
  %s6 = ssub.s32 1, %s4
  %s7 = scalar_select 0, %s6, %s4
  $region1: #{tpu_custom_call.1} parent=0
    #allocation2 [shape = 'u8[4096]{0}', space=vmem, size = 0x1000, scoped, tag = 'output window, operand 0, single buffered']
    #allocation3 [shape = 's32[1]{0}', space=sflag, size = 0x4, scoped, tag = 'scoped memory for tpu_custom_call.1']
    %8 = vsyncpa [#allocation3], 0
    // Predicated region
    $region2: #{tpu_custom_call.1} parent=1 // pred_check
      _
    $region3: #{tpu_custom_call.1} parent=1 // pred_check_branch
      %10 = sbr.rel (0) target = $region5
    $region4: #{tpu_custom_call.1} parent=1 // pred_region
      _
    $region5: #{tpu_custom_call.1} parent=1 // pred_fallthru
      _
    // Predicated region
    $region6: #{tpu_custom_call.1} parent=1 // pred_check
      _
    $region7: #{tpu_custom_call.1} parent=1 // pred_check_branch
      %12 = sbr.rel (0) target = $region9
    $region8: #{tpu_custom_call.1} parent=1 // pred_region
      %s13 = sadd.s32 0, 0
      %s14 = smul.u32 32, %s13
      %p15 = scmp.lt.s32.totalorder %s14, 31
      %s16 = scalar_select %p15, %s14, 31
      %s17 = smul.addr %s16, 8
      %s18 = scalar_lea.vmem %s1, %s17
      %s19 = sadd.s32 0, 0
      %s20 = smul.u32 32, %s19
    $region9: #{tpu_custom_call.1} parent=1 // pred_fallthru
      _
    // Predicated region
    $region10: #{tpu_custom_call.1} parent=1 // pred_check
      _
    $region11: #{tpu_custom_call.1} parent=1 // pred_check_branch
      %22 = sbr.rel (0) target = $region13
    $region12: #{tpu_custom_call.1} parent=1 // pred_region
      _
    $region13: #{tpu_custom_call.1} parent=1 // pred_fallthru
      _
    %s23 = sadd.s32 0, 0
    %s24 = smul.u32 32, %s23
    %p25 = scmp.lt.s32.totalorder %s24, 31
    %s26 = scalar_select %p25, %s24, 31
    %s27 = smul.addr %s26, 8
    %s28 = scalar_lea.vmem %s1, %s27
    %s29 = sadd.s32 0, 0
    %s30 = smul.u32 32, %s29
    %p31 = scmp.lt.s32.totalorder %s30, 31
    %s32 = scalar_select %p31, %s30, 31
    %s33 = smul.addr %s32, 8
    %s34 = scalar_lea.vmem %s1, %s33
    %s35 = sadd.s32 0, 0
    %s36 = smul.u32 32, %s35
    %p38 = scmp.eq.s32.totalorder 0, 0
    // Predicated region
    $region14: #{tpu_custom_call.1} parent=1 // pred_check
      %p39 = pneg %p38
    $region15: #{tpu_custom_call.1} parent=1 // pred_check_branch
      %41 = sbr.rel (%p39) target = $region17
    $region16: #{tpu_custom_call.1} parent=1 // pred_region
      %42 = vst [vmem:[#allocation2] sm:$0xff] 0.0
    $region17: #{tpu_custom_call.1} parent=1 // pred_fallthru
      _
    %v43 = vld [vmem:[%s34] sm:$0xff]
    %v44 = vld [vmem:[%s34 + $0x8] sm:$0xff]
    %v45 = vld [vmem:[%s34 + $0x10] sm:$0xff]
    %v46 = vld [vmem:[%s34 + $0x18] sm:$0xff]
    %v47 = vld [vmem:[%s34 + $0x20] sm:$0xff]
    %v48 = vld [vmem:[%s34 + $0x28] sm:$0xff]
    %v49 = vld [vmem:[%s34 + $0x30] sm:$0xff]
    %v50 = vld [vmem:[%s34 + $0x38] sm:$0xff]
    %v51 = vld [vmem:[%s34 + $0x40] sm:$0xff]
    %v52 = vld [vmem:[%s34 + $0x48] sm:$0xff]
    %v53 = vld [vmem:[%s34 + $0x50] sm:$0xff]
    %v54 = vld [vmem:[%s34 + $0x58] sm:$0xff]
    %v55 = vld [vmem:[%s34 + $0x60] sm:$0xff]
    %v56 = vld [vmem:[%s34 + $0x68] sm:$0xff]
    %v57 = vld [vmem:[%s34 + $0x70] sm:$0xff]
    %v58 = vld [vmem:[%s34 + $0x78] sm:$0xff]
    %v59 = vld [vmem:[%s34 + $0x80] sm:$0xff]
    %v60 = vld [vmem:[%s34 + $0x88] sm:$0xff]
    %v61 = vld [vmem:[%s34 + $0x90] sm:$0xff]
    %v62 = vld [vmem:[%s34 + $0x98] sm:$0xff]
    %v63 = vld [vmem:[%s34 + $0xa0] sm:$0xff]
    %v64 = vld [vmem:[%s34 + $0xa8] sm:$0xff]
    %v65 = vld [vmem:[%s34 + $0xb0] sm:$0xff]
    %v66 = vld [vmem:[%s34 + $0xb8] sm:$0xff]
    %v67 = vld [vmem:[%s34 + $0xc0] sm:$0xff]
    %v68 = vld [vmem:[%s34 + $0xc8] sm:$0xff]
    %v69 = vld [vmem:[%s34 + $0xd0] sm:$0xff]
    %v70 = vld [vmem:[%s34 + $0xd8] sm:$0xff]
    %v71 = vld [vmem:[%s34 + $0xe0] sm:$0xff]
    %v72 = vld [vmem:[%s34 + $0xe8] sm:$0xff]
    %v73 = vld [vmem:[%s34 + $0xf0] sm:$0xff]
    %v74 = vld [vmem:[%s34 + $0xf8] sm:$0xff]
    %v75 = vld [vmem:[%s2] sm:$0xff]
    %77 = vset.pattern.permute.xlu0 0
    %78 = vperm.xlu0 %77, %v43
    %v79 = vpop.permute.xlu0 %78
    %82 = vset.pattern.permute.xlu0 0
    %83 = vperm.xlu0 %82, %v44
    %v84 = vpop.permute.xlu0 %83
    %87 = vset.pattern.permute.xlu0 0
    %88 = vperm.xlu0 %87, %v45
    %v89 = vpop.permute.xlu0 %88
    %92 = vset.pattern.permute.xlu0 0
    %93 = vperm.xlu0 %92, %v46
    %v94 = vpop.permute.xlu0 %93
    %97 = vset.pattern.permute.xlu0 0
    %98 = vperm.xlu0 %97, %v47
    %v99 = vpop.permute.xlu0 %98
    %102 = vset.pattern.permute.xlu0 0
    %103 = vperm.xlu0 %102, %v48
    %v104 = vpop.permute.xlu0 %103
    %107 = vset.pattern.permute.xlu0 0
    %108 = vperm.xlu0 %107, %v49
    %v109 = vpop.permute.xlu0 %108
    %112 = vset.pattern.permute.xlu0 0
    %113 = vperm.xlu0 %112, %v50
    %v114 = vpop.permute.xlu0 %113
    %117 = vset.pattern.permute.xlu0 0
    %118 = vperm.xlu0 %117, %v51
    %v119 = vpop.permute.xlu0 %118
    %122 = vset.pattern.permute.xlu0 0
    %123 = vperm.xlu0 %122, %v52
    %v124 = vpop.permute.xlu0 %123
    %127 = vset.pattern.permute.xlu0 0
    %128 = vperm.xlu0 %127, %v53
    %v129 = vpop.permute.xlu0 %128
    %132 = vset.pattern.permute.xlu0 0
    %133 = vperm.xlu0 %132, %v54
    %v134 = vpop.permute.xlu0 %133
    %137 = vset.pattern.permute.xlu0 0
    %138 = vperm.xlu0 %137, %v55
    %v139 = vpop.permute.xlu0 %138
    %142 = vset.pattern.permute.xlu0 0
    %143 = vperm.xlu0 %142, %v56
    %v144 = vpop.permute.xlu0 %143
    %147 = vset.pattern.permute.xlu0 0
    %148 = vperm.xlu0 %147, %v57
    %v149 = vpop.permute.xlu0 %148
    %152 = vset.pattern.permute.xlu0 0
    %153 = vperm.xlu0 %152, %v58
    %v154 = vpop.permute.xlu0 %153
    %157 = vset.pattern.permute.xlu0 0
    %158 = vperm.xlu0 %157, %v59
    %v159 = vpop.permute.xlu0 %158
    %162 = vset.pattern.permute.xlu0 0
    %163 = vperm.xlu0 %162, %v60
    %v164 = vpop.permute.xlu0 %163
    %167 = vset.pattern.permute.xlu0 0
    %168 = vperm.xlu0 %167, %v61
    %v169 = vpop.permute.xlu0 %168
    %172 = vset.pattern.permute.xlu0 0
    %173 = vperm.xlu0 %172, %v62
    %v174 = vpop.permute.xlu0 %173
    %177 = vset.pattern.permute.xlu0 0
    %178 = vperm.xlu0 %177, %v63
    %v179 = vpop.permute.xlu0 %178
    %182 = vset.pattern.permute.xlu0 0
    %183 = vperm.xlu0 %182, %v64
    %v184 = vpop.permute.xlu0 %183
    %187 = vset.pattern.permute.xlu0 0
    %188 = vperm.xlu0 %187, %v65
    %v189 = vpop.permute.xlu0 %188
    %192 = vset.pattern.permute.xlu0 0
    %193 = vperm.xlu0 %192, %v66
    %v194 = vpop.permute.xlu0 %193
    %197 = vset.pattern.permute.xlu0 0
    %198 = vperm.xlu0 %197, %v67
    %v199 = vpop.permute.xlu0 %198
    %202 = vset.pattern.permute.xlu0 0
    %203 = vperm.xlu0 %202, %v68
    %v204 = vpop.permute.xlu0 %203
    %207 = vset.pattern.permute.xlu0 0
    %208 = vperm.xlu0 %207, %v69
    %v209 = vpop.permute.xlu0 %208
    %212 = vset.pattern.permute.xlu0 0
    %213 = vperm.xlu0 %212, %v70
    %v214 = vpop.permute.xlu0 %213
    %217 = vset.pattern.permute.xlu0 0
    %218 = vperm.xlu0 %217, %v71
    %v219 = vpop.permute.xlu0 %218
    %222 = vset.pattern.permute.xlu0 0
    %223 = vperm.xlu0 %222, %v72
    %v224 = vpop.permute.xlu0 %223
    %227 = vset.pattern.permute.xlu0 0
    %228 = vperm.xlu0 %227, %v73
    %v229 = vpop.permute.xlu0 %228
    %232 = vset.pattern.permute.xlu0 0
    %233 = vperm.xlu0 %232, %v74
    %v234 = vpop.permute.xlu0 %233
    %v236 = vlaneseq
    %v237 = vshrl.u32 %v236, 7
    %v238 = vsub.s32 0, %v237
    %v239 = vrot.slane %v75, %v238
    %v240 = vsub.f32 %v79, %v239
    %v241 = vsub.f32 %v84, %v239
    %v242 = vsub.f32 %v89, %v239
    %v243 = vsub.f32 %v94, %v239
    %v244 = vsub.f32 %v99, %v239
    %v245 = vsub.f32 %v104, %v239
    %v246 = vsub.f32 %v109, %v239
    %v247 = vsub.f32 %v114, %v239
    %v248 = vsub.f32 %v119, %v239
    %v249 = vsub.f32 %v124, %v239
    %v250 = vsub.f32 %v129, %v239
    %v251 = vsub.f32 %v134, %v239
    %v252 = vsub.f32 %v139, %v239
    %v253 = vsub.f32 %v144, %v239
    %v254 = vsub.f32 %v149, %v239
    %v255 = vsub.f32 %v154, %v239
    %v256 = vsub.f32 %v159, %v239
    %v257 = vsub.f32 %v164, %v239
    %v258 = vsub.f32 %v169, %v239
    %v259 = vsub.f32 %v174, %v239
    %v260 = vsub.f32 %v179, %v239
    %v261 = vsub.f32 %v184, %v239
    %v262 = vsub.f32 %v189, %v239
    %v263 = vsub.f32 %v194, %v239
    %v264 = vsub.f32 %v199, %v239
    %v265 = vsub.f32 %v204, %v239
    %v266 = vsub.f32 %v209, %v239
    %v267 = vsub.f32 %v214, %v239
    %v268 = vsub.f32 %v219, %v239
    %v269 = vsub.f32 %v224, %v239
    %v270 = vsub.f32 %v229, %v239
    %v271 = vsub.f32 %v234, %v239
    %v272 = vlaneseq
    %v273 = vshrl.u32 %v272, 7
    %v274 = vsub.s32 2, %v273
    %v275 = vrot.slane %v75, %v274
    %v276 = vmul.f32 %v275, %v240
    %v277 = vmul.f32 %v275, %v241
    %v278 = vmul.f32 %v275, %v242
    %v279 = vmul.f32 %v275, %v243
    %v280 = vmul.f32 %v275, %v244
    %v281 = vmul.f32 %v275, %v245
    %v282 = vmul.f32 %v275, %v246
    %v283 = vmul.f32 %v275, %v247
    %v284 = vmul.f32 %v275, %v248
    %v285 = vmul.f32 %v275, %v249
    %v286 = vmul.f32 %v275, %v250
    %v287 = vmul.f32 %v275, %v251
    %v288 = vmul.f32 %v275, %v252
    %v289 = vmul.f32 %v275, %v253
    %v290 = vmul.f32 %v275, %v254
    %v291 = vmul.f32 %v275, %v255
    %v292 = vmul.f32 %v275, %v256
    %v293 = vmul.f32 %v275, %v257
    %v294 = vmul.f32 %v275, %v258
    %v295 = vmul.f32 %v275, %v259
    %v296 = vmul.f32 %v275, %v260
    %v297 = vmul.f32 %v275, %v261
    %v298 = vmul.f32 %v275, %v262
    %v299 = vmul.f32 %v275, %v263
    %v300 = vmul.f32 %v275, %v264
    %v301 = vmul.f32 %v275, %v265
    %v302 = vmul.f32 %v275, %v266
    %v303 = vmul.f32 %v275, %v267
    %v304 = vmul.f32 %v275, %v268
    %v305 = vmul.f32 %v275, %v269
    %v306 = vmul.f32 %v275, %v270
    %v307 = vmul.f32 %v275, %v271
    %v308 = vmul.f32 %v276, %v276
    %v309 = vmul.f32 %v277, %v277
    %v310 = vmul.f32 %v278, %v278
    %v311 = vmul.f32 %v279, %v279
    %v312 = vmul.f32 %v280, %v280
    %v313 = vmul.f32 %v281, %v281
    %v314 = vmul.f32 %v282, %v282
    %v315 = vmul.f32 %v283, %v283
    %v316 = vmul.f32 %v284, %v284
    %v317 = vmul.f32 %v285, %v285
    %v318 = vmul.f32 %v286, %v286
    %v319 = vmul.f32 %v287, %v287
    %v320 = vmul.f32 %v288, %v288
    %v321 = vmul.f32 %v289, %v289
    %v322 = vmul.f32 %v290, %v290
    %v323 = vmul.f32 %v291, %v291
    %v324 = vmul.f32 %v292, %v292
    %v325 = vmul.f32 %v293, %v293
    %v326 = vmul.f32 %v294, %v294
    %v327 = vmul.f32 %v295, %v295
    %v328 = vmul.f32 %v296, %v296
    %v329 = vmul.f32 %v297, %v297
    %v330 = vmul.f32 %v298, %v298
    %v331 = vmul.f32 %v299, %v299
    %v332 = vmul.f32 %v300, %v300
    %v333 = vmul.f32 %v301, %v301
    %v334 = vmul.f32 %v302, %v302
    %v335 = vmul.f32 %v303, %v303
    %v336 = vmul.f32 %v304, %v304
    %v337 = vmul.f32 %v305, %v305
    %v338 = vmul.f32 %v306, %v306
    %v339 = vmul.f32 %v307, %v307
    %340 = vset.pattern.permute.xlu0 1
    %341 = vperm.xlu0 %340, %v43
    %v342 = vpop.permute.xlu0 %341
    %344 = vset.pattern.permute.xlu0 1
    %345 = vperm.xlu0 %344, %v44
    %v346 = vpop.permute.xlu0 %345
    %348 = vset.pattern.permute.xlu0 1
    %349 = vperm.xlu0 %348, %v45
    %v350 = vpop.permute.xlu0 %349
    %352 = vset.pattern.permute.xlu0 1
    %353 = vperm.xlu0 %352, %v46
    %v354 = vpop.permute.xlu0 %353
    %356 = vset.pattern.permute.xlu0 1
    %357 = vperm.xlu0 %356, %v47
    %v358 = vpop.permute.xlu0 %357
    %360 = vset.pattern.permute.xlu0 1
    %361 = vperm.xlu0 %360, %v48
    %v362 = vpop.permute.xlu0 %361
    %364 = vset.pattern.permute.xlu0 1
    %365 = vperm.xlu0 %364, %v49
    %v366 = vpop.permute.xlu0 %365
    %368 = vset.pattern.permute.xlu0 1
    %369 = vperm.xlu0 %368, %v50
    %v370 = vpop.permute.xlu0 %369
    %372 = vset.pattern.permute.xlu0 1
    %373 = vperm.xlu0 %372, %v51
    %v374 = vpop.permute.xlu0 %373
    %376 = vset.pattern.permute.xlu0 1
    %377 = vperm.xlu0 %376, %v52
    %v378 = vpop.permute.xlu0 %377
    %380 = vset.pattern.permute.xlu0 1
    %381 = vperm.xlu0 %380, %v53
    %v382 = vpop.permute.xlu0 %381
    %384 = vset.pattern.permute.xlu0 1
    %385 = vperm.xlu0 %384, %v54
    %v386 = vpop.permute.xlu0 %385
    %388 = vset.pattern.permute.xlu0 1
    %389 = vperm.xlu0 %388, %v55
    %v390 = vpop.permute.xlu0 %389
    %392 = vset.pattern.permute.xlu0 1
    %393 = vperm.xlu0 %392, %v56
    %v394 = vpop.permute.xlu0 %393
    %396 = vset.pattern.permute.xlu0 1
    %397 = vperm.xlu0 %396, %v57
    %v398 = vpop.permute.xlu0 %397
    %400 = vset.pattern.permute.xlu0 1
    %401 = vperm.xlu0 %400, %v58
    %v402 = vpop.permute.xlu0 %401
    %404 = vset.pattern.permute.xlu0 1
    %405 = vperm.xlu0 %404, %v59
    %v406 = vpop.permute.xlu0 %405
    %408 = vset.pattern.permute.xlu0 1
    %409 = vperm.xlu0 %408, %v60
    %v410 = vpop.permute.xlu0 %409
    %412 = vset.pattern.permute.xlu0 1
    %413 = vperm.xlu0 %412, %v61
    %v414 = vpop.permute.xlu0 %413
    %416 = vset.pattern.permute.xlu0 1
    %417 = vperm.xlu0 %416, %v62
    %v418 = vpop.permute.xlu0 %417
    %420 = vset.pattern.permute.xlu0 1
    %421 = vperm.xlu0 %420, %v63
    %v422 = vpop.permute.xlu0 %421
    %424 = vset.pattern.permute.xlu0 1
    %425 = vperm.xlu0 %424, %v64
    %v426 = vpop.permute.xlu0 %425
    %428 = vset.pattern.permute.xlu0 1
    %429 = vperm.xlu0 %428, %v65
    %v430 = vpop.permute.xlu0 %429
    %432 = vset.pattern.permute.xlu0 1
    %433 = vperm.xlu0 %432, %v66
    %v434 = vpop.permute.xlu0 %433
    %436 = vset.pattern.permute.xlu0 1
    %437 = vperm.xlu0 %436, %v67
    %v438 = vpop.permute.xlu0 %437
    %440 = vset.pattern.permute.xlu0 1
    %441 = vperm.xlu0 %440, %v68
    %v442 = vpop.permute.xlu0 %441
    %444 = vset.pattern.permute.xlu0 1
    %445 = vperm.xlu0 %444, %v69
    %v446 = vpop.permute.xlu0 %445
    %448 = vset.pattern.permute.xlu0 1
    %449 = vperm.xlu0 %448, %v70
    %v450 = vpop.permute.xlu0 %449
    %452 = vset.pattern.permute.xlu0 1
    %453 = vperm.xlu0 %452, %v71
    %v454 = vpop.permute.xlu0 %453
    %456 = vset.pattern.permute.xlu0 1
    %457 = vperm.xlu0 %456, %v72
    %v458 = vpop.permute.xlu0 %457
    %460 = vset.pattern.permute.xlu0 1
    %461 = vperm.xlu0 %460, %v73
    %v462 = vpop.permute.xlu0 %461
    %464 = vset.pattern.permute.xlu0 1
    %465 = vperm.xlu0 %464, %v74
    %v466 = vpop.permute.xlu0 %465
    %v468 = vlaneseq
    %v469 = vshrl.u32 %v468, 7
    %v470 = vsub.s32 1, %v469
    %v471 = vrot.slane %v75, %v470
    %v472 = vsub.f32 %v342, %v471
    %v473 = vsub.f32 %v346, %v471
    %v474 = vsub.f32 %v350, %v471
    %v475 = vsub.f32 %v354, %v471
    %v476 = vsub.f32 %v358, %v471
    %v477 = vsub.f32 %v362, %v471
    %v478 = vsub.f32 %v366, %v471
    %v479 = vsub.f32 %v370, %v471
    %v480 = vsub.f32 %v374, %v471
    %v481 = vsub.f32 %v378, %v471
    %v482 = vsub.f32 %v382, %v471
    %v483 = vsub.f32 %v386, %v471
    %v484 = vsub.f32 %v390, %v471
    %v485 = vsub.f32 %v394, %v471
    %v486 = vsub.f32 %v398, %v471
    %v487 = vsub.f32 %v402, %v471
    %v488 = vsub.f32 %v406, %v471
    %v489 = vsub.f32 %v410, %v471
    %v490 = vsub.f32 %v414, %v471
    %v491 = vsub.f32 %v418, %v471
    %v492 = vsub.f32 %v422, %v471
    %v493 = vsub.f32 %v426, %v471
    %v494 = vsub.f32 %v430, %v471
    %v495 = vsub.f32 %v434, %v471
    %v496 = vsub.f32 %v438, %v471
    %v497 = vsub.f32 %v442, %v471
    %v498 = vsub.f32 %v446, %v471
    %v499 = vsub.f32 %v450, %v471
    %v500 = vsub.f32 %v454, %v471
    %v501 = vsub.f32 %v458, %v471
    %v502 = vsub.f32 %v462, %v471
    %v503 = vsub.f32 %v466, %v471
    %v504 = vlaneseq
    %v505 = vshrl.u32 %v504, 7
    %v506 = vsub.s32 3, %v505
    %v507 = vrot.slane %v75, %v506
    %v508 = vmul.f32 %v507, %v472
    %v509 = vmul.f32 %v507, %v473
    %v510 = vmul.f32 %v507, %v474
    %v511 = vmul.f32 %v507, %v475
    %v512 = vmul.f32 %v507, %v476
    %v513 = vmul.f32 %v507, %v477
    %v514 = vmul.f32 %v507, %v478
    %v515 = vmul.f32 %v507, %v479
    %v516 = vmul.f32 %v507, %v480
    %v517 = vmul.f32 %v507, %v481
    %v518 = vmul.f32 %v507, %v482
    %v519 = vmul.f32 %v507, %v483
    %v520 = vmul.f32 %v507, %v484
    %v521 = vmul.f32 %v507, %v485
    %v522 = vmul.f32 %v507, %v486
    %v523 = vmul.f32 %v507, %v487
    %v524 = vmul.f32 %v507, %v488
    %v525 = vmul.f32 %v507, %v489
    %v526 = vmul.f32 %v507, %v490
    %v527 = vmul.f32 %v507, %v491
    %v528 = vmul.f32 %v507, %v492
    %v529 = vmul.f32 %v507, %v493
    %v530 = vmul.f32 %v507, %v494
    %v531 = vmul.f32 %v507, %v495
    %v532 = vmul.f32 %v507, %v496
    %v533 = vmul.f32 %v507, %v497
    %v534 = vmul.f32 %v507, %v498
    %v535 = vmul.f32 %v507, %v499
    %v536 = vmul.f32 %v507, %v500
    %v537 = vmul.f32 %v507, %v501
    %v538 = vmul.f32 %v507, %v502
    %v539 = vmul.f32 %v507, %v503
    %v540 = vmul.f32 %v508, %v508
    %v541 = vmul.f32 %v509, %v509
    %v542 = vmul.f32 %v510, %v510
    %v543 = vmul.f32 %v511, %v511
    %v544 = vmul.f32 %v512, %v512
    %v545 = vmul.f32 %v513, %v513
    %v546 = vmul.f32 %v514, %v514
    %v547 = vmul.f32 %v515, %v515
    %v548 = vmul.f32 %v516, %v516
    %v549 = vmul.f32 %v517, %v517
    %v550 = vmul.f32 %v518, %v518
    %v551 = vmul.f32 %v519, %v519
    %v552 = vmul.f32 %v520, %v520
    %v553 = vmul.f32 %v521, %v521
    %v554 = vmul.f32 %v522, %v522
    %v555 = vmul.f32 %v523, %v523
    %v556 = vmul.f32 %v524, %v524
    %v557 = vmul.f32 %v525, %v525
    %v558 = vmul.f32 %v526, %v526
    %v559 = vmul.f32 %v527, %v527
    %v560 = vmul.f32 %v528, %v528
    %v561 = vmul.f32 %v529, %v529
    %v562 = vmul.f32 %v530, %v530
    %v563 = vmul.f32 %v531, %v531
    %v564 = vmul.f32 %v532, %v532
    %v565 = vmul.f32 %v533, %v533
    %v566 = vmul.f32 %v534, %v534
    %v567 = vmul.f32 %v535, %v535
    %v568 = vmul.f32 %v536, %v536
    %v569 = vmul.f32 %v537, %v537
    %v570 = vmul.f32 %v538, %v538
    %v571 = vmul.f32 %v539, %v539
    %v572 = vadd.f32 %v308, %v540
    %v573 = vadd.f32 %v309, %v541
    %v574 = vadd.f32 %v310, %v542
    %v575 = vadd.f32 %v311, %v543
    %v576 = vadd.f32 %v312, %v544
    %v577 = vadd.f32 %v313, %v545
    %v578 = vadd.f32 %v314, %v546
    %v579 = vadd.f32 %v315, %v547
    %v580 = vadd.f32 %v316, %v548
    %v581 = vadd.f32 %v317, %v549
    %v582 = vadd.f32 %v318, %v550
    %v583 = vadd.f32 %v319, %v551
    %v584 = vadd.f32 %v320, %v552
    %v585 = vadd.f32 %v321, %v553
    %v586 = vadd.f32 %v322, %v554
    %v587 = vadd.f32 %v323, %v555
    %v588 = vadd.f32 %v324, %v556
    %v589 = vadd.f32 %v325, %v557
    %v590 = vadd.f32 %v326, %v558
    %v591 = vadd.f32 %v327, %v559
    %v592 = vadd.f32 %v328, %v560
    %v593 = vadd.f32 %v329, %v561
    %v594 = vadd.f32 %v330, %v562
    %v595 = vadd.f32 %v331, %v563
    %v596 = vadd.f32 %v332, %v564
    %v597 = vadd.f32 %v333, %v565
    %v598 = vadd.f32 %v334, %v566
    %v599 = vadd.f32 %v335, %v567
    %v600 = vadd.f32 %v336, %v568
    %v601 = vadd.f32 %v337, %v569
    %v602 = vadd.f32 %v338, %v570
    %v603 = vadd.f32 %v339, %v571
    %v604 = vsub.f32 0.0, %v572
    %v605 = vsub.f32 0.0, %v573
    %v606 = vsub.f32 0.0, %v574
    %v607 = vsub.f32 0.0, %v575
    %v608 = vsub.f32 0.0, %v576
    %v609 = vsub.f32 0.0, %v577
    %v610 = vsub.f32 0.0, %v578
    %v611 = vsub.f32 0.0, %v579
    %v612 = vsub.f32 0.0, %v580
    %v613 = vsub.f32 0.0, %v581
    %v614 = vsub.f32 0.0, %v582
    %v615 = vsub.f32 0.0, %v583
    %v616 = vsub.f32 0.0, %v584
    %v617 = vsub.f32 0.0, %v585
    %v618 = vsub.f32 0.0, %v586
    %v619 = vsub.f32 0.0, %v587
    %v620 = vsub.f32 0.0, %v588
    %v621 = vsub.f32 0.0, %v589
    %v622 = vsub.f32 0.0, %v590
    %v623 = vsub.f32 0.0, %v591
    %v624 = vsub.f32 0.0, %v592
    %v625 = vsub.f32 0.0, %v593
    %v626 = vsub.f32 0.0, %v594
    %v627 = vsub.f32 0.0, %v595
    %v628 = vsub.f32 0.0, %v596
    %v629 = vsub.f32 0.0, %v597
    %v630 = vsub.f32 0.0, %v598
    %v631 = vsub.f32 0.0, %v599
    %v632 = vsub.f32 0.0, %v600
    %v633 = vsub.f32 0.0, %v601
    %v634 = vsub.f32 0.0, %v602
    %v635 = vsub.f32 0.0, %v603
    %v636 = vmul.f32 %v604, 1.442695
    %v637 = vpow.pop %v636
    %v638 = vmul.f32 %v605, 1.442695
    %v639 = vpow.pop %v638
    %v640 = vmul.f32 %v606, 1.442695
    %v641 = vpow.pop %v640
    %v642 = vmul.f32 %v607, 1.442695
    %v643 = vpow.pop %v642
    %v644 = vmul.f32 %v608, 1.442695
    %v645 = vpow.pop %v644
    %v646 = vmul.f32 %v609, 1.442695
    %v647 = vpow.pop %v646
    %v648 = vmul.f32 %v610, 1.442695
    %v649 = vpow.pop %v648
    %v650 = vmul.f32 %v611, 1.442695
    %v651 = vpow.pop %v650
    %v652 = vmul.f32 %v612, 1.442695
    %v653 = vpow.pop %v652
    %v654 = vmul.f32 %v613, 1.442695
    %v655 = vpow.pop %v654
    %v656 = vmul.f32 %v614, 1.442695
    %v657 = vpow.pop %v656
    %v658 = vmul.f32 %v615, 1.442695
    %v659 = vpow.pop %v658
    %v660 = vmul.f32 %v616, 1.442695
    %v661 = vpow.pop %v660
    %v662 = vmul.f32 %v617, 1.442695
    %v663 = vpow.pop %v662
    %v664 = vmul.f32 %v618, 1.442695
    %v665 = vpow.pop %v664
    %v666 = vmul.f32 %v619, 1.442695
    %v667 = vpow.pop %v666
    %v668 = vmul.f32 %v620, 1.442695
    %v669 = vpow.pop %v668
    %v670 = vmul.f32 %v621, 1.442695
    %v671 = vpow.pop %v670
    %v672 = vmul.f32 %v622, 1.442695
    %v673 = vpow.pop %v672
    %v674 = vmul.f32 %v623, 1.442695
    %v675 = vpow.pop %v674
    %v676 = vmul.f32 %v624, 1.442695
    %v677 = vpow.pop %v676
    %v678 = vmul.f32 %v625, 1.442695
    %v679 = vpow.pop %v678
    %v680 = vmul.f32 %v626, 1.442695
    %v681 = vpow.pop %v680
    %v682 = vmul.f32 %v627, 1.442695
    %v683 = vpow.pop %v682
    %v684 = vmul.f32 %v628, 1.442695
    %v685 = vpow.pop %v684
    %v686 = vmul.f32 %v629, 1.442695
    %v687 = vpow.pop %v686
    %v688 = vmul.f32 %v630, 1.442695
    %v689 = vpow.pop %v688
    %v690 = vmul.f32 %v631, 1.442695
    %v691 = vpow.pop %v690
    %v692 = vmul.f32 %v632, 1.442695
    %v693 = vpow.pop %v692
    %v694 = vmul.f32 %v633, 1.442695
    %v695 = vpow.pop %v694
    %v696 = vmul.f32 %v634, 1.442695
    %v697 = vpow.pop %v696
    %v698 = vmul.f32 %v635, 1.442695
    %v699 = vpow.pop %v698
    %s700 = sadd.s32 0, 0
    %s701 = smul.u32 %s700, 256
    %v702 = vlaneseq
    %v703 = vand.u32 %v702, 127
    %v704 = vadd.s32 %v703, 128
    %v705 = vstv %s701
    %v706 = vadd.s32 %v705, %v703
    %v707 = vadd.s32 %v705, %v704
    %v708 = vld [vmem:[%s0] sm:$0xff]
    %709 = vset.pattern.permute.xlu0 0
    %710 = vperm.xlu0 %709, %v708
    %v711 = vpop.permute.xlu0 %710
    %vm712 = vcmp.ge.s32.totalorder %v706, %v711
    %vm713 = vcmp.ge.s32.totalorder %v707, %v711
    %714 = vset.pattern.permute.xlu0 1
    %715 = vperm.xlu0 %714, %v708
    %v716 = vpop.permute.xlu0 %715
    %vm717 = vcmp.lt.s32.totalorder %v706, %v716
    %vm718 = vcmp.lt.s32.totalorder %v707, %v716
    %vm719 = vmand %vm712, %vm717
    %vm720 = vmand %vm713, %vm718
    %v721 = vsel %vm719, 1, 0
    %v722 = vsel %vm720, 1, 0
    %v723 = vcvt.s32.f32 %v721
    %v724 = vcvt.s32.f32 %v722
    %v725 = vpack.c.bf16 %v723, %v723
    %v726 = vpack.c.bf16 %v724, %v724
    %v727 = vld [vmem:[#allocation2] sm:$0xff]
    %v728 = vpack.c.bf16 %v639, %v637
    %v729 = vpack.c.bf16 %v643, %v641
    %v730 = vpack.c.bf16 %v647, %v645
    %v731 = vpack.c.bf16 %v651, %v649
    %v732 = vpack.c.bf16 %v655, %v653
    %v733 = vpack.c.bf16 %v659, %v657
    %v734 = vpack.c.bf16 %v663, %v661
    %v735 = vpack.c.bf16 %v667, %v665
    %v736 = vpack.c.bf16 %v671, %v669
    %v737 = vpack.c.bf16 %v675, %v673
    %v738 = vpack.c.bf16 %v679, %v677
    %v739 = vpack.c.bf16 %v683, %v681
    %v740 = vpack.c.bf16 %v687, %v685
    %v741 = vpack.c.bf16 %v691, %v689
    %v742 = vpack.c.bf16 %v695, %v693
    %v743 = vpack.c.bf16 %v699, %v697
    %744 = vmatprep.subr.bf16.mxu0 0
    %745 = vmatpush1.bf16.msra.mxu0 %v728
    %746 = vmatprep.subr.bf16.mxu0 0
    %747 = vmatpush1.bf16.msra.mxu0 %v729
    %748 = vmatprep.subr.bf16.mxu0 0
    %749 = vmatpush1.bf16.msra.mxu0 %v730
    %750 = vmatprep.subr.bf16.mxu0 0
    %751 = vmatpush1.bf16.msra.mxu0 %v731
    %752 = vmatprep.subr.bf16.mxu0 0
    %753 = vmatpush1.bf16.msra.mxu0 %v732
    %754 = vmatprep.subr.bf16.mxu0 0
    %755 = vmatpush1.bf16.msra.mxu0 %v733
    %756 = vmatprep.subr.bf16.mxu0 0
    %757 = vmatpush1.bf16.msra.mxu0 %v734
    %758 = vmatprep.subr.bf16.mxu0 0
    %759 = vmatpush1.bf16.msra.mxu0 %v735
    %760 = vmatprep.subr.bf16.mxu0 0
    %761 = vmatpush1.bf16.msra.mxu0 %v736
    %762 = vmatprep.subr.bf16.mxu0 0
    %763 = vmatpush1.bf16.msra.mxu0 %v737
    %764 = vmatprep.subr.bf16.mxu0 0
    %765 = vmatpush1.bf16.msra.mxu0 %v738
    %766 = vmatprep.subr.bf16.mxu0 0
    %767 = vmatpush1.bf16.msra.mxu0 %v739
    %768 = vmatprep.subr.bf16.mxu0 0
    %769 = vmatpush1.bf16.msra.mxu0 %v740
    %770 = vmatprep.subr.bf16.mxu0 0
    %771 = vmatpush1.bf16.msra.mxu0 %v741
    %772 = vmatprep.subr.bf16.mxu0 0
    %773 = vmatpush1.bf16.msra.mxu0 %v742
    %774 = vmatprep.subr.bf16.mxu0 0
    %775 = vmatpush1.bf16.msra.mxu0 %v743
    %776 = vmatprep.mubr.bf16.mxu0 %v726
    %777 = vmatmul.mubr.bf16.gmra.mrb[0].mxu0 %v725
    %v778 = vpop.f32.mrb[0].mxu0
    %v779 = vadd.f32 0.0, %v778
    %v780 = vpop.f32.mrb[0].mxu0
    %v781 = vpop.f32.mrb[0].mxu0
    %v782 = vpop.f32.mrb[0].mxu0
    %783 = vdwg.mxu0
    %v784 = vadd.f32 %v727, %v779
    %785 = vst [vmem:[#allocation2] sm:$0xff] %v784
    // Predicated region
    $region18: #{tpu_custom_call.1} parent=1 // pred_check
      _
    $region19: #{tpu_custom_call.1} parent=1 // pred_check_branch
      %787 = sbr.rel (0) target = $region21
    $region20: #{tpu_custom_call.1} parent=1 // pred_region
      %s789 = ssub.s32 128, 128
      %790 = vsyncadd [#allocation3], %s789
      %s792 = sshll.u32 [#allocation2], 4
      %s793 = int_to_ptr.vmem [resolvable:$true] %s792
      %795 = dma.vmem_to_hbm [thread:$0]  %s793, 128, %s3, [#allocation3]
    $region21: #{tpu_custom_call.1} parent=1 // pred_fallthru
      _
    // Predicated region
    $region22: #{tpu_custom_call.1} parent=1 // pred_check
      _
    $region23: #{tpu_custom_call.1} parent=1 // pred_check_branch
      %797 = sbr.rel (0) target = $region25
    $region24: #{tpu_custom_call.1} parent=1 // pred_region
      %798 = dma.done [#allocation3], 128
    $region25: #{tpu_custom_call.1} parent=1 // pred_fallthru
      _
    %799 = vsyncpa [#allocation3], 1

</llo_original>
